<compile_context>
chip_gen: v6e
topology: v6e:2x2x1
jax: 0.10.0
libtpu: 0.0.40
codegen_flags: <defaults>
</compile_context>

<pallas_src>
import functools

import jax
import jax.numpy as jnp
from jax.experimental import pallas as pl
from jax.experimental.pallas import tpu as pltpu


def _dma_copy_kernel(x_hbm, o_hbm, sem):
    # Single HBM->HBM DMA covering the whole array; one DMA semaphore scratch.
    cp = pltpu.make_async_copy(x_hbm, o_hbm, sem)
    cp.start()
    cp.wait()


@jax.jit
def _hbm_copy(x):
    """Physical copy of `x` into a fresh HBM buffer via one direct DMA."""
    itemsize = jnp.dtype(x.dtype).itemsize
    return pl.pallas_call(
        _dma_copy_kernel,
        out_shape=jax.ShapeDtypeStruct(x.shape, x.dtype),
        # Raw HBM refs on both sides: no VMEM staging, no blocking, no grid.
        in_specs=[pl.BlockSpec(memory_space=pl.ANY)],
        out_specs=pl.BlockSpec(memory_space=pl.ANY),
        scratch_shapes=[pltpu.SemaphoreType.DMA(())],
        # Pure-bandwidth op: zero flops, exactly one read + one write pass.
        cost_estimate=pl.CostEstimate(
            flops=0,
            transcendentals=0,
            bytes_accessed=2 * x.size * itemsize,
        ),
    )(x)


def semantic_encoder_forward(x, model_type: str = "cnn", snr=None, cr=None,
                             force_copy: bool = False):
    """Pallas equivalent of Semantic_Encoder.forward for the default config.

    x: jnp.ndarray of shape (B, C, H, W)  (NCHW, like PyTorch).

    With the default constructor arguments the PyTorch encoder is an empty
    nn.Sequential, i.e. the identity, so the optimized path returns x with
    zero HBM traffic. Set force_copy=True only if a physically distinct output
    buffer is contractually required; that path runs one HBM->HBM DMA.
    """
    if "vit" in model_type:
        # TODO(synk): 'vit' branch delegates to an external WITT transformer
        # encoder (models.test_advanced_network...), not part of this module's
        # own graph; no Pallas port is provided.
        raise NotImplementedError("'vit' model_type uses an external encoder")

    if not force_copy or x.size == 0:
        return x  # identity: no launch, no bytes moved
    return _hbm_copy(x)


if __name__ == "__main__":
    key = jax.random.PRNGKey(0)
    # Small shape consistent with the module's NCHW input convention.
    x = jax.random.normal(key, (2, 4, 16, 16), dtype=jnp.float32)

    # Primary (optimized) path: identity pass-through, no kernel launch.
    y_fast = jax.block_until_ready(semantic_encoder_forward(x, model_type="cnn"))

    # Exercise the Pallas HBM->HBM DMA copy once (fresh-buffer path).
    y_copy = jax.block_until_ready(
        semantic_encoder_forward(x, model_type="cnn", force_copy=True)
    )

    assert y_fast.shape == x.shape and y_fast.dtype == x.dtype
    assert y_copy.shape == x.shape and y_copy.dtype == x.dtype
    assert bool(jnp.all(y_fast == x))
    assert bool(jnp.all(y_copy == x))

    print("KERNEL_OK")
</pallas_src>

<mosaic_0001>
module attributes {stable_mosaic.version = 11 : i64} {
  func.func @_dma_copy_kernel(%arg0: memref<2x4x16x16xf32, #tpu.memory_space<any>>, %arg1: memref<2x4x16x16xf32, #tpu.memory_space<any>>, %arg2: memref<!tpu.dma_semaphore, #tpu.memory_space<semaphore_mem>>) attributes {dimension_semantics = [], scalar_prefetch = 0 : i64, scratch_operands = 1 : i64, tpu.core_type = #tpu.core_type<tc>} {
    tpu.enqueue_dma source(%arg0 : memref<2x4x16x16xf32, #tpu.memory_space<any>>) target(%arg1 : memref<2x4x16x16xf32, #tpu.memory_space<any>>) target_semaphore(%arg2 : memref<!tpu.dma_semaphore, #tpu.memory_space<semaphore_mem>>)
    tpu.wait_dma2 semaphore(%arg2 : memref<!tpu.dma_semaphore, #tpu.memory_space<semaphore_mem>>) src(%arg0 : memref<2x4x16x16xf32, #tpu.memory_space<any>>) dst(%arg1 : memref<2x4x16x16xf32, #tpu.memory_space<any>>)
    return
  }
}

</mosaic_0001>

<llo_original>
// kernel: _hbm_copy.1
$region0: #{_hbm_copy.1}
  #allocation0 [shape = 'u32[]', space=smem, size = 0x4, offset = 0x4, fixed_abs, tag = 'smem constant byte address 0x4 - core index']
  #allocation1 [shape = 'u32[144,128]{1,0:T(1,128)}', space=vmem, size = 0x12000, scoped, tag = 'internal scratch']
  #allocation2 [shape = 's32[1]{0}', space=sflag, size = 0x4, scoped, tag = 'scratch operand']
  #allocation3 [shape = 's32[]', space=sflag, size = 0x4, offset = 0, fixed_abs, tag = 'sflag constant byte address 0x0 - dummy sync flag']
  #allocation4 [shape = 'u32[0]{0}', space=smem, size = 0, offset = 0, fixed_abs, tag = 'smem constant byte address 0x0 - null']
  %s0 = inlined_call_operand.hbm [shape: f32[2,4,16,16], index: 0, kind: input, shape index: {}]
  %s1 = inlined_call_operand.hbm [shape: f32[2,4,16,16], index: 1, kind: output, shape index: {}]
  %s2 = sld [smem:[#allocation0]]
  $region2: #{_hbm_copy.1} parent=0
    _
  %s4 = ssub.s32 1, %s2
  %s5 = scalar_select 0, %s4, %s2
  %s7 = sshll.u32 1, 14
  %s8 = sxor.u32 4294967295, %s7
  %12 = dma.general %s0, 2048, %s1, [#allocation2], 131072, [#allocation4], 0, 0
  %s13 = smul.u32 2, 4
  %s14 = smul.u32 %s13, 16
  %s15 = smul.u32 %s14, 1
  %s16 = sshll.u32 %s15, 4
  %17 = dma.done [#allocation2], %s16
  %18 = vsyncmov [#allocation2]
  %s19 = vpop.sfrf %18
  %p20 = scmp.eq.s32.totalorder %s19, 0
  %p21 = pneg %p20
  %23 = shalt.err (%p21)

</llo_original>
